<compile_context>
chip_gen: v6e
topology: v6e:2x2x1
jax: 0.10.0
libtpu: 0.0.40
codegen_flags: <defaults>
</compile_context>

<pallas_src>
import math

import jax
import jax.numpy as jnp
from jax.experimental import pallas as pl
from jax.experimental.pallas import tpu as pltpu


def make_positional_encoding(d_model: int, max_seq_length: int = 200,
                             dtype=jnp.float32) -> jnp.ndarray:
    """Deterministic parameter-setup (mirrors the PyTorch __init__ buffer)."""
    position = jnp.arange(max_seq_length, dtype=jnp.float32)[:, None]            # (L, 1)
    div_term = jnp.exp(
        jnp.arange(0, d_model, 2, dtype=jnp.float32) * (-math.log(10000.0) / d_model)
    )                                                                             # (ceil(D/2),)
    pe = jnp.zeros((max_seq_length, d_model), dtype=jnp.float32)
    pe = pe.at[:, 0::2].set(jnp.sin(position * div_term))
    # trim for odd d_model (identical to PyTorch semantics for even d_model)
    pe = pe.at[:, 1::2].set(jnp.cos(position * div_term[: d_model // 2]))
    return pe.astype(dtype)                                                       # (L, d_model)


def _pe_add_kernel(x_ref, pe_ref, o_ref):
    # x_ref:  (tb, tc) lane-dense tile of the flattened activations
    # pe_ref: (1, tc)  matching chunk of the positional encoding (broadcast over rows)
    o_ref[...] = (x_ref[...] + pe_ref[...]).astype(o_ref.dtype)


def _pick_col_tile(total_cols: int) -> int:
    """Largest lane-dense (multiple-of-128) column tile that evenly divides total_cols."""
    if total_cols % 128 != 0:
        # Fallback: full-extent last dim is always a legal block shape.
        return total_cols
    for cand in (8192, 4096, 2048, 1024, 512, 256, 128):
        if total_cols % cand == 0:
            return cand
    return total_cols


def _pick_row_tile(batch: int, col_tile: int, itemsize: int,
                   max_block_bytes: int = 2 << 20) -> int:
    """Row tile: full batch if it fits the per-block budget, else a multiple-of-8 divisor."""
    if batch * col_tile * itemsize <= max_block_bytes:
        return batch
    cand = (max_block_bytes // (col_tile * itemsize)) // 8 * 8
    while cand >= 8:
        if batch % cand == 0:
            return cand
        cand -= 8
    return batch  # full batch dim is always a legal block shape


def positional_encoding_forward(x: jnp.ndarray, pe: jnp.ndarray) -> jnp.ndarray:
    """x: (B, S, D); pe: (max_seq_length, D). Returns x + pe[None, :S, :]."""
    B, S, D = x.shape
    # Static slice of the buffer (== self.pe[:, :x.size(1), :]) cast to the activation dtype
    # so bf16 activations keep bf16 traffic and the in-kernel add stays in native dtype.
    pe_slice = pe[:S, :].astype(x.dtype)

    # Lane-dense 2-D slab: last dim is S*D (a multiple of 128 for typical d_model),
    # so stores are full-width vst instead of masked vst.msk on a 32-lane tail.
    total = S * D
    x2 = x.reshape(B, total)
    pe2 = pe_slice.reshape(1, total)

    itemsize = jnp.dtype(x.dtype).itemsize
    tc = _pick_col_tile(total)
    tb = _pick_row_tile(B, tc, itemsize)
    grid = (B // tb, total // tc)

    # VMEM footprint: (2 x-in + 2 x-out + 2 pe) buffers * <=2 MiB block  << 32 MiB,
    # safe on v5e (16 MiB scoped default raised here), v6e and v7x (64 MiB physical).
    out2 = pl.pallas_call(
        _pe_add_kernel,
        out_shape=jax.ShapeDtypeStruct((B, total), x.dtype),
        grid=grid,
        in_specs=[
            pl.BlockSpec((tb, tc), lambda i, j: (i, j)),   # x tile
            pl.BlockSpec((1, tc), lambda i, j: (0, j)),    # pe chunk, batch-invariant
        ],
        out_specs=pl.BlockSpec((tb, tc), lambda i, j: (i, j)),
        compiler_params=pltpu.CompilerParams(
            dimension_semantics=("parallel", "parallel"),
            vmem_limit_bytes=32 * 1024 * 1024,
        ),
        # TODO(synk): the only remaining win for this mem-bound add is fusing it into the
        # adjacent embedding/dropout/matmul kernel (or donating x via input_output_aliases
        # at a jit boundary where x is actually donatable); a standalone x+pe is hard-capped
        # at 2 reads + 1 write of x-sized HBM traffic.
    )(x2, pe2)

    return out2.reshape(B, S, D)


if __name__ == "__main__":
    # Small shapes consistent with the module's forward: (batch, seq, d_model)
    B, S, D = 2, 8, 32
    MAX_SEQ = 200

    key = jax.random.PRNGKey(0)
    x = jax.random.normal(key, (B, S, D), dtype=jnp.float32)

    pe = make_positional_encoding(D, MAX_SEQ)

    out = positional_encoding_forward(x, pe)
    out = jax.block_until_ready(out)

    # Reference check against plain-JAX semantics of the PyTorch forward.
    ref = x + pe[None, :S, :]
    assert out.shape == (B, S, D)
    assert jnp.allclose(out, ref, atol=1e-6), "mismatch vs reference"

    print("KERNEL_OK")
</pallas_src>

<mosaic_0001>
module attributes {stable_mosaic.version = 11 : i64} {
  func.func @_pe_add_kernel(%arg0: i32, %arg1: i32, %arg2: memref<2x256xf32, #tpu.memory_space<vmem>>, %arg3: memref<1x256xf32, #tpu.memory_space<vmem>>, %arg4: memref<2x256xf32, #tpu.memory_space<vmem>>) attributes {dimension_semantics = [#tpu.dimension_semantics<parallel>, #tpu.dimension_semantics<parallel>], iteration_bounds = array<i64: 1, 1>, scalar_prefetch = 0 : i64, scratch_operands = 0 : i64, tpu.core_type = #tpu.core_type<tc>, window_params = [{transform_indices = @transform_0, window_bounds = array<i64: 2, 256>}, {transform_indices = @transform_1, window_bounds = array<i64: 1, 256>}, {transform_indices = @transform_2, window_bounds = array<i64: 2, 256>}]} {
    %c0 = arith.constant 0 : index
    %c0_0 = arith.constant 0 : index
    %0 = vector.load %arg2[%c0, %c0_0] : memref<2x256xf32, #tpu.memory_space<vmem>>, vector<2x256xf32>
    %c0_1 = arith.constant 0 : index
    %c0_2 = arith.constant 0 : index
    %1 = vector.load %arg3[%c0_1, %c0_2] : memref<1x256xf32, #tpu.memory_space<vmem>>, vector<1x256xf32>
    %2 = vector.broadcast %1 : vector<1x256xf32> to vector<2x256xf32>
    %3 = arith.addf %0, %2 : vector<2x256xf32>
    %c0_3 = arith.constant 0 : index
    %c0_4 = arith.constant 0 : index
    %4 = vector.load %arg4[%c0_3, %c0_4] : memref<2x256xf32, #tpu.memory_space<vmem>>, vector<2x256xf32>
    tpu.vector_store %arg4[%c0_3, %c0_4], %3 {strides = array<i32>} : memref<2x256xf32, #tpu.memory_space<vmem>>, vector<2x256xf32>,
    return
  }
  func.func @transform_0(%arg0: i32, %arg1: i32) -> (i32, i32) {
    %c0_i32 = arith.constant 0 : i32
    return %arg0, %arg1 : i32, i32
  }
  func.func @transform_1(%arg0: i32, %arg1: i32) -> (i32, i32) {
    %c0_i32 = arith.constant 0 : i32
    %c0_i32_0 = arith.constant 0 : i32
    return %c0_i32, %arg1 : i32, i32
  }
  func.func @transform_2(%arg0: i32, %arg1: i32) -> (i32, i32) {
    %c0_i32 = arith.constant 0 : i32
    return %arg0, %arg1 : i32, i32
  }
}

</mosaic_0001>

<llo_original>
// kernel: tpu_custom_call.1
$region0: #{tpu_custom_call.1}
  #allocation0 [shape = 'u32[]', space=smem, size = 0x4, offset = 0x4, fixed_abs, tag = 'smem constant byte address 0x4 - core index']
  #allocation1 [shape = 'u32[144,128]{1,0:T(1,128)}', space=vmem, size = 0x12000, scoped, tag = 'internal scratch']
  %s0 = inlined_call_operand.hbm [shape: f32[2,256], index: 0, kind: input, shape index: {}]
  %s1 = inlined_call_operand.hbm [shape: f32[1,256], index: 1, kind: input, shape index: {}]
  %s2 = inlined_call_operand.hbm [shape: f32[2,256], index: 2, kind: output, shape index: {}]
  %s3 = sld [smem:[#allocation0]]
  $region26: #{tpu_custom_call.1} parent=0
    _
  %s5 = ssub.s32 1, %s3
  %s6 = scalar_select 0, %s5, %s3
  $region1: #{tpu_custom_call.1} parent=0
    #allocation2 [shape = 'u8[2048]{0}', space=vmem, size = 0x800, scoped, tag = 'input window, operand 0, single buffered']
    #allocation3 [shape = 's32[1]{0}', space=sflag, size = 0x4, scoped, tag = 'scoped memory for tpu_custom_call.1']
    #allocation4 [shape = 's32[1]{0}', space=sflag, size = 0x4, scoped, tag = 'scoped memory for tpu_custom_call.1']
    #allocation5 [shape = 'u8[1024]{0}', space=vmem, size = 0x400, scoped, tag = 'input window, operand 1, single buffered']
    #allocation6 [shape = 's32[1]{0}', space=sflag, size = 0x4, scoped, tag = 'scoped memory for tpu_custom_call.1']
    #allocation7 [shape = 'u8[2048]{0}', space=vmem, size = 0x800, scoped, tag = 'output window, operand 0, single buffered']
    %7 = vsyncpa [#allocation3], 0
    %8 = vsyncpa [#allocation6], 0
    %9 = vsyncpa [#allocation4], 0
    // Predicated region
    $region2: #{tpu_custom_call.1} parent=1 // pred_check
      _
    $region3: #{tpu_custom_call.1} parent=1 // pred_check_branch
      %11 = sbr.rel (0) target = $region5
    $region4: #{tpu_custom_call.1} parent=1 // pred_region
      %s13 = ssub.s32 64, 64
      %14 = vsyncadd [#allocation3], %s13
      %s16 = sshll.u32 [#allocation2], 4
      %s17 = int_to_ptr.vmem [resolvable:$true] %s16
      %19 = dma.hbm_to_vmem [thread:$0]  %s0, 64, %s17, [#allocation3]
    $region5: #{tpu_custom_call.1} parent=1 // pred_fallthru
      _
    // Predicated region
    $region6: #{tpu_custom_call.1} parent=1 // pred_check
      _
    $region7: #{tpu_custom_call.1} parent=1 // pred_check_branch
      %21 = sbr.rel (0) target = $region9
    $region8: #{tpu_custom_call.1} parent=1 // pred_region
      %s23 = ssub.s32 32, 32
      %24 = vsyncadd [#allocation6], %s23
      %s26 = sshll.u32 [#allocation5], 4
      %s27 = int_to_ptr.vmem [resolvable:$true] %s26
      %29 = dma.hbm_to_vmem [thread:$0]  %s1, 32, %s27, [#allocation6]
    $region9: #{tpu_custom_call.1} parent=1 // pred_fallthru
      _
    // Predicated region
    $region10: #{tpu_custom_call.1} parent=1 // pred_check
      _
    $region11: #{tpu_custom_call.1} parent=1 // pred_check_branch
      %31 = sbr.rel (0) target = $region13
    $region12: #{tpu_custom_call.1} parent=1 // pred_region
      %32 = dma.done [#allocation3], 64
    $region13: #{tpu_custom_call.1} parent=1 // pred_fallthru
      _
    // Predicated region
    $region14: #{tpu_custom_call.1} parent=1 // pred_check
      _
    $region15: #{tpu_custom_call.1} parent=1 // pred_check_branch
      %34 = sbr.rel (0) target = $region17
    $region16: #{tpu_custom_call.1} parent=1 // pred_region
      %35 = dma.done [#allocation6], 32
    $region17: #{tpu_custom_call.1} parent=1 // pred_fallthru
      _
    %v36 = vld [vmem:[#allocation2] sm:$0xf]
    %v37 = vld [vmem:[#allocation5] sm:$0x3]
    %v39 = vlaneseq
    %v40 = vshrl.u32 %v39, 7
    %v41 = vsub.s32 0, %v40
    %v42 = vrot.slane %v37, %v41
    %v43 = vlaneseq
    %v44 = vshrl.u32 %v43, 7
    %v45 = vsub.s32 1, %v44
    %v46 = vrot.slane %v37, %v45
    %v47 = vcombine.low %v42, %v46
    %v49 = vunpack.c.l.s4 1983009808
    %v50 = vunpack.c.0.s8 %v49
    %v51 = vlaneseq
    %v52 = vshrl.u32 %v51, 7
    %v53 = vsub.s32 %v50, %v52
    %v54 = vrot.slane %v47, %v53
    %v56 = vadd.f32 %v36, %v54
    %57 = vst [vmem:[#allocation7] sm:$0xf] %v56
    // Predicated region
    $region18: #{tpu_custom_call.1} parent=1 // pred_check
      _
    $region19: #{tpu_custom_call.1} parent=1 // pred_check_branch
      %59 = sbr.rel (0) target = $region21
    $region20: #{tpu_custom_call.1} parent=1 // pred_region
      %s61 = ssub.s32 64, 64
      %62 = vsyncadd [#allocation4], %s61
      %s64 = sshll.u32 [#allocation7], 4
      %s65 = int_to_ptr.vmem [resolvable:$true] %s64
      %67 = dma.vmem_to_hbm [thread:$0]  %s65, 64, %s2, [#allocation4]
    $region21: #{tpu_custom_call.1} parent=1 // pred_fallthru
      _
    // Predicated region
    $region22: #{tpu_custom_call.1} parent=1 // pred_check
      _
    $region23: #{tpu_custom_call.1} parent=1 // pred_check_branch
      %69 = sbr.rel (0) target = $region25
    $region24: #{tpu_custom_call.1} parent=1 // pred_region
      %70 = dma.done [#allocation4], 64
    $region25: #{tpu_custom_call.1} parent=1 // pred_fallthru
      _
    %71 = vsyncpa [#allocation3], 1
    %72 = vsyncpa [#allocation6], 1
    %73 = vsyncpa [#allocation4], 1

</llo_original>
